<compile_context>
chip_gen: v7x
topology: tpu7x:2x2x1
jax: 0.10.0
libtpu: 0.0.40
codegen_flags: <defaults>
</compile_context>

<pallas_src>
import jax
import jax.numpy as jnp
from jax import lax
from jax.experimental import pallas as pl
from jax.experimental.pallas import tpu as pltpu

MV_DIM = 16  # number of GA(1,3) multivector components


# ----------------------------------------------------------------------------
# Pallas kernel: whole synthetic GAP net for one lane-dense tile of samples.
# ----------------------------------------------------------------------------
def _gap_kernel(x_ref, wbig_ref, b1_ref, wip_ref, w2_ref, b2_ref, out_ref):
    # x_ref:    (TN, 16)  natural sample-major 4-momenta, 16 = (item i, comp c)
    # wbig_ref: (4J, 16)  block-diagonal item-mixing weight (see wrapper)
    # b1_ref:   (J, 1)    gate bias
    # wip_ref:  (J, 1)    inner-product weight
    # w2_ref:   (J, 1)    readout weight
    # b2_ref:   SMEM (1,) readout bias
    # out_ref:  (1, TN)   amplitude per sample (lane-dense)
    j = b1_ref.shape[0]

    # One MXU matmul does the item contraction for all 4 momentum components at
    # once AND the sample-major -> component-major relayout (NT form, q @ k^T):
    #   H[c*J + j, n] = sum_i w1[i, j] * x[n, i, c]
    h = lax.dot_general(
        wbig_ref[...], x_ref[...],
        dimension_numbers=(((1,), (1,)), ((), ())),
        preferred_element_type=jnp.float32)              # (4J, TN)

    # GA(1,3) vector-grade inner product.  The metric signs (+,-,-,-) are
    # compile-time constants and the slices are clean 8-aligned sublane slices.
    h_e = h[0 * j:1 * j]
    h_x = h[1 * j:2 * j]
    h_y = h[2 * j:3 * j]
    h_z = h[3 * j:4 * j]
    ip = h_e * h_e - h_x * h_x - h_y * h_y - h_z * h_z   # (J, TN)

    # Scalar grade of the hidden multivectors: the grade-0 input channel and the
    # auxiliary scalars are identically zero, so h0 = wip * ip exactly.
    h0 = wip_ref[...] * ip                                # (J, TN)
    z = h0 + b1_ref[...]
    gate = z / (1.0 + jnp.exp(-1.702 * z))                # sigmoid-form GELU (exp on EUP)
    hg = h0 * gate

    # Readout: sublane (XLU) reduction over J -> lane-dense (1, TN) row.
    out_ref[...] = jnp.sum(w2_ref[...] * hg, axis=0, keepdims=True) + b2_ref[0]


# ----------------------------------------------------------------------------
# Tile-size selection (generation aware).
# ----------------------------------------------------------------------------
def _default_block_n():
    """Default lane-tile width (samples per grid step)."""
    try:
        kind = jax.devices()[0].device_kind.lower()
    except Exception:
        return 8192
    # v5e / v6e have 128 MiB VMEM per TensorCore -> bigger tiles amortize the
    # ~0.35 us/step overhead further.  v7x (64 MiB VMEM, 2 TCs) and unknown
    # chips stay at 8192 so several grid steps fit and both cores get work.
    if "v5 lite" in kind or "v5e" in kind or "v6" in kind:
        return 16384
    return 8192


def _choose_tile_n(n, block_n):
    """Lane-tile width: as large as allowed, a multiple of 128, and with at
    least two grid steps for any non-tiny N (v7x megacore sharding)."""
    block_n = max(128, (block_n // 128) * 128)
    if n <= 1024:
        return n                               # tiny problem: one full-extent tile
    half = (((n + 1) // 2) + 127) // 128 * 128  # ensures grid_n >= 2
    return min(block_n, half)


# ----------------------------------------------------------------------------
# Wrapper: embed_into_ga -> Pallas net -> extract_from_ga
# ----------------------------------------------------------------------------
def amplitude_gap_forward(params, inputs, type_token=None, global_token=None,
                          attn_mask=None, *, block_n=None):
    # type_token / global_token / attn_mask are accepted but unused, exactly as
    # in the reference module's forward (it never reads them).
    P, B, I, four = inputs.shape
    assert four == 4, "expected 4-momenta in the last axis"
    N = P * B

    # embed_into_ga is implicit: only mv[..., 1:5] (the vector grade) is ever
    # nonzero and the auxiliary scalars are zeros, so the net only needs the raw
    # 4-momenta.  They are consumed in their natural (N, 16) sample-major layout
    # (item-major, component-minor); no wrapper-side HBM transpose pass.
    x2d = inputs.astype(jnp.float32).reshape(N, I * 4)

    J = params["w1t"].shape[1]
    # Block-diagonal item-mixing weight feeding the MXU:
    #   w_big[c*J + j, i*4 + c'] = w1[i, j] * (c == c')
    w_big = jnp.einsum("ij,cd->cjid", params["w1t"].astype(jnp.float32),
                       jnp.eye(4, dtype=jnp.float32)).reshape(4 * J, 4 * I)
    b1 = params["b1"].reshape(J, 1).astype(jnp.float32)
    wip = params["wip"].reshape(J, 1).astype(jnp.float32)
    w2 = params["w2t"].reshape(J, 1).astype(jnp.float32)
    b2 = params["b2"].reshape(1).astype(jnp.float32)
    # The GA(1,3) vector-grade signature (+,-,-,-) is a fixed property of the
    # algebra and is hard-coded inside the kernel; params["metric"] is only used
    # by the pure-JAX reference.

    if block_n is None:
        block_n = _default_block_n()
    tile_n = _choose_tile_n(N, block_n)
    grid_n = pl.cdiv(N, tile_n)
    # Scale the scoped-VMEM limit with the tile (v5e's default is only 16 MiB);
    # <= 48 MiB on the v7x-safe path, <= 96 MiB on the big-tile v5e/v6e path.
    vmem_limit = int(min(96 * 2 ** 20, max(32 * 2 ** 20, 3 * 2048 * tile_n)))

    out = pl.pallas_call(
        _gap_kernel,
        out_shape=jax.ShapeDtypeStruct((1, N), jnp.float32),
        grid_spec=pltpu.PrefetchScalarGridSpec(
            num_scalar_prefetch=0,
            grid=(grid_n,),
            in_specs=[
                pl.BlockSpec((tile_n, 4 * I), lambda n: (n, 0)),   # momenta tile
                pl.BlockSpec((4 * J, 4 * I), lambda n: (0, 0)),    # W_big (resident)
                pl.BlockSpec((J, 1), lambda n: (0, 0)),            # b1
                pl.BlockSpec((J, 1), lambda n: (0, 0)),            # wip
                pl.BlockSpec((J, 1), lambda n: (0, 0)),            # w2
                pl.BlockSpec(memory_space=pltpu.MemorySpace.SMEM), # b2 scalar
            ],
            out_specs=pl.BlockSpec((1, tile_n), lambda n: (0, n)),
        ),
        compiler_params=pltpu.CompilerParams(
            dimension_semantics=("parallel",),
            vmem_limit_bytes=vmem_limit),
    )(x2d, w_big, b1, wip, w2, b2)

    # extract_from_ga: the kernel produced the scalar grade of the output
    # multivector per sample; reshape back to (P, B, 1).
    return out.reshape(P, B, 1)


# ----------------------------------------------------------------------------
# Deterministic parameter init and a pure-JAX reference (full 16-component
# multivector + zero scalars, i.e. the original wrapper semantics) proving the
# zero-dropping and metric folding in the kernel are mathematically exact.
# ----------------------------------------------------------------------------
def init_params(key, num_items, hidden):
    k1, k2, k3, k4, k5, k6 = jax.random.split(key, 6)
    # w1 is rounded to bf16-representable values so the MXU's operand rounding
    # is exact and the kernel-vs-reference check stays tight regardless of how
    # the compiler decomposes the f32 matmul into bf16 passes.
    w1t = (0.5 * jax.random.normal(k1, (num_items, hidden), jnp.float32)
           ).astype(jnp.bfloat16).astype(jnp.float32)
    return {
        "w1t": w1t,
        "b1": 0.1 * jax.random.normal(k2, (1, hidden), jnp.float32),
        # wst multiplies identically-zero scalars; kept for interface parity,
        # not used by the kernel.
        "wst": 0.5 * jax.random.normal(k3, (1, hidden), jnp.float32),
        "wip": 0.5 * jax.random.normal(k4, (1, hidden), jnp.float32),
        "w2t": 0.5 * jax.random.normal(k5, (hidden, 1), jnp.float32),
        "b2": 0.1 * jax.random.normal(k6, (1, 1), jnp.float32),
        # Synthetic GA(1,3)-style metric signs over the 16 components.
        "metric": jnp.array(
            [1.0] + [1.0, -1.0, -1.0, -1.0] + [-1.0] * 6 + [1.0] * 4 + [-1.0],
            jnp.float32),
    }


def reference_forward(params, inputs):
    """Original wrapper semantics: full 16-component multivector embedding and
    zero auxiliary scalars (f32-exact einsums via precision=HIGHEST)."""
    hp = lax.Precision.HIGHEST
    x = inputs.astype(jnp.float32)
    P, B, I, _ = x.shape
    mv = jnp.zeros((P, B, I, MV_DIM), jnp.float32).at[..., 1:5].set(x)
    scalars = jnp.zeros((P, B, 1), jnp.float32)
    h = jnp.einsum("pbic,ij->pbcj", mv, params["w1t"], precision=hp)
    ip = jnp.einsum("pbcj,c->pbj", h * h, params["metric"], precision=hp)
    h0 = h[..., 0, :] + params["wip"] * ip
    s = jnp.einsum("pbk,kj->pbj", scalars, params["wst"], precision=hp)
    z = h0 + s + params["b1"]
    gate = z / (1.0 + jnp.exp(-1.702 * z))
    amp = jnp.einsum("pbj,jk->pbk", h0 * gate, params["w2t"], precision=hp)
    return amp + params["b2"]                                       # (P, B, 1)


if __name__ == "__main__":
    key = jax.random.PRNGKey(0)
    k_par, k_in1, k_in2, k_in3 = jax.random.split(key, 4)

    P, B, I, HID = 2, 8, 4, 32   # processes, batch, particles, hidden channels
    params = init_params(k_par, I, HID)

    def make_inputs(k, p, b):
        # bf16-representable test momenta -> exact MXU operand rounding, so the
        # comparison below is meaningful at tight tolerances on any generation.
        x = jax.random.normal(k, (p, b, I, 4), jnp.float32)
        return x.astype(jnp.bfloat16).astype(jnp.float32)

    def check(x, amp, name):
        ref = reference_forward(params, x)
        assert amp.shape == ref.shape, (name, amp.shape, ref.shape)
        err = jnp.max(jnp.abs(amp - ref))
        assert jnp.allclose(amp, ref, rtol=1e-4, atol=5e-4), (
            f"mismatch ({name}): max abs err {err}")

    # --- small shape: single tile (tile_n == N = 16) --------------------------
    x1 = make_inputs(k_in1, P, B)
    type_token = jnp.zeros((P, I), jnp.int32)      # unused (as in the module)
    global_token = jnp.zeros((P,), jnp.int32)      # unused (as in the module)
    amp1 = jax.block_until_ready(
        amplitude_gap_forward(params, x1, type_token, global_token))
    assert amp1.shape == (P, B, 1), amp1.shape
    check(x1, amp1, "small/single-tile")

    # --- multi-tile, exactly divisible grid (N = 2048, tile_n = 512, grid 4) --
    x2 = make_inputs(k_in2, 4, 512)
    amp2 = jax.block_until_ready(
        amplitude_gap_forward(params, x2, block_n=512))
    check(x2, amp2, "multi-tile/aligned")

    # --- multi-tile with a ragged trailing block (N = 2100) -------------------
    x3 = make_inputs(k_in3, 3, 700)
    amp3 = jax.block_until_ready(amplitude_gap_forward(params, x3))
    check(x3, amp3, "multi-tile/ragged")

    print("KERNEL_OK")
</pallas_src>

<mosaic_0001>
module attributes {stable_mosaic.version = 11 : i64} {
  func.func @_gap_kernel(%arg0: i32, %arg1: memref<16x16xf32, #tpu.memory_space<vmem>>, %arg2: memref<128x16xf32, #tpu.memory_space<vmem>>, %arg3: memref<32x1xf32, #tpu.memory_space<vmem>>, %arg4: memref<32x1xf32, #tpu.memory_space<vmem>>, %arg5: memref<32x1xf32, #tpu.memory_space<vmem>>, %arg6: memref<1xf32, #tpu.memory_space<smem>>, %arg7: memref<1x16xf32, #tpu.memory_space<vmem>>) attributes {dimension_semantics = [#tpu.dimension_semantics<parallel>], iteration_bounds = array<i64: 1>, scalar_prefetch = 0 : i64, scratch_operands = 0 : i64, tpu.core_type = #tpu.core_type<tc>, window_params = [{transform_indices = @transform_0, window_bounds = array<i64: 16, 16>}, {pipeline_mode = #tpu.pipeline_mode<synchronous>, transform_indices = @transform_1, window_bounds = array<i64: 128, 16>}, {pipeline_mode = #tpu.pipeline_mode<synchronous>, transform_indices = @transform_2, window_bounds = array<i64: 32, 1>}, {pipeline_mode = #tpu.pipeline_mode<synchronous>, transform_indices = @transform_3, window_bounds = array<i64: 32, 1>}, {pipeline_mode = #tpu.pipeline_mode<synchronous>, transform_indices = @transform_4, window_bounds = array<i64: 32, 1>}, {transform_indices = @transform_5, window_bounds = array<i64: 1>}, {transform_indices = @transform_6, window_bounds = array<i64: 1, 16>}]} {
    %c0 = arith.constant 0 : index
    %c0_0 = arith.constant 0 : index
    %0 = vector.load %arg2[%c0, %c0_0] : memref<128x16xf32, #tpu.memory_space<vmem>>, vector<128x16xf32>
    %c0_1 = arith.constant 0 : index
    %c0_2 = arith.constant 0 : index
    %1 = vector.load %arg1[%c0_1, %c0_2] : memref<16x16xf32, #tpu.memory_space<vmem>>, vector<16x16xf32>
    %cst = arith.constant dense<0.000000e+00> : vector<128x16xf32>
    %2 = tpu.matmul %0, %1, %cst {dimension_numbers = #tpu.dot_dimension_numbers<[1], [1], [0], [0], [0, 0, 1, 0], [], []>} : vector<128x16xf32>, vector<16x16xf32>, vector<128x16xf32> -> vector<128x16xf32>
    %3 = vector.extract_strided_slice %2 {offsets = [0, 0], sizes = [32, 16], strides = [1, 1]} : vector<128x16xf32> to vector<32x16xf32>
    %4 = vector.extract_strided_slice %2 {offsets = [32, 0], sizes = [32, 16], strides = [1, 1]} : vector<128x16xf32> to vector<32x16xf32>
    %5 = vector.extract_strided_slice %2 {offsets = [64, 0], sizes = [32, 16], strides = [1, 1]} : vector<128x16xf32> to vector<32x16xf32>
    %6 = vector.extract_strided_slice %2 {offsets = [96, 0], sizes = [32, 16], strides = [1, 1]} : vector<128x16xf32> to vector<32x16xf32>
    %7 = arith.mulf %3, %3 : vector<32x16xf32>
    %8 = arith.mulf %4, %4 : vector<32x16xf32>
    %9 = arith.subf %7, %8 : vector<32x16xf32>
    %10 = arith.mulf %5, %5 : vector<32x16xf32>
    %11 = arith.subf %9, %10 : vector<32x16xf32>
    %12 = arith.mulf %6, %6 : vector<32x16xf32>
    %13 = arith.subf %11, %12 : vector<32x16xf32>
    %c0_3 = arith.constant 0 : index
    %c0_4 = arith.constant 0 : index
    %14 = vector.load %arg4[%c0_3, %c0_4] : memref<32x1xf32, #tpu.memory_space<vmem>>, vector<32x1xf32>
    %15 = vector.broadcast %14 : vector<32x1xf32> to vector<32x16xf32>
    %16 = arith.mulf %15, %13 : vector<32x16xf32>
    %c0_5 = arith.constant 0 : index
    %c0_6 = arith.constant 0 : index
    %17 = vector.load %arg3[%c0_5, %c0_6] : memref<32x1xf32, #tpu.memory_space<vmem>>, vector<32x1xf32>
    %18 = vector.broadcast %17 : vector<32x1xf32> to vector<32x16xf32>
    %19 = arith.addf %16, %18 : vector<32x16xf32>
    %cst_7 = arith.constant -1.702000e+00 : f32
    %20 = vector.broadcast %cst_7 : f32 to vector<32x16xf32>
    %21 = arith.mulf %20, %19 : vector<32x16xf32>
    %22 = math.exp %21 : vector<32x16xf32>
    %cst_8 = arith.constant 1.000000e+00 : f32
    %23 = vector.broadcast %cst_8 : f32 to vector<32x16xf32>
    %24 = arith.addf %23, %22 : vector<32x16xf32>
    %25 = arith.divf %19, %24 : vector<32x16xf32>
    %26 = arith.mulf %16, %25 : vector<32x16xf32>
    %c0_9 = arith.constant 0 : index
    %c0_10 = arith.constant 0 : index
    %27 = vector.load %arg5[%c0_9, %c0_10] : memref<32x1xf32, #tpu.memory_space<vmem>>, vector<32x1xf32>
    %28 = vector.broadcast %27 : vector<32x1xf32> to vector<32x16xf32>
    %29 = arith.mulf %28, %26 : vector<32x16xf32>
    %cst_11 = arith.constant dense<0.000000e+00> : vector<16xf32>
    %30 = vector.multi_reduction <add>, %29, %cst_11 [0] : vector<32x16xf32> to vector<16xf32>
    %31 = vector.shape_cast %30 : vector<16xf32> to vector<1x16xf32>
    %c0_12 = arith.constant 0 : index
    %32 = memref.load %arg6[%c0_12] : memref<1xf32, #tpu.memory_space<smem>>
    %33 = vector.broadcast %32 : f32 to vector<1x16xf32>
    %34 = arith.addf %31, %33 : vector<1x16xf32>
    %c0_13 = arith.constant 0 : index
    %c0_14 = arith.constant 0 : index
    %35 = vector.load %arg7[%c0_13, %c0_14] : memref<1x16xf32, #tpu.memory_space<vmem>>, vector<1x16xf32>
    tpu.vector_store %arg7[%c0_13, %c0_14], %34 {strides = array<i32>} : memref<1x16xf32, #tpu.memory_space<vmem>>, vector<1x16xf32>,
    return
  }
  func.func @transform_0(%arg0: i32) -> (i32, i32) {
    %c0_i32 = arith.constant 0 : i32
    %c0_i32_0 = arith.constant 0 : i32
    return %arg0, %c0_i32 : i32, i32
  }
  func.func @transform_1(%arg0: i32) -> (i32, i32) {
    %c0_i32 = arith.constant 0 : i32
    %c0_i32_0 = arith.constant 0 : i32
    %c0_i32_1 = arith.constant 0 : i32
    return %c0_i32, %c0_i32_0 : i32, i32
  }
  func.func @transform_2(%arg0: i32) -> (i32, i32) {
    %c0_i32 = arith.constant 0 : i32
    %c0_i32_0 = arith.constant 0 : i32
    %c0_i32_1 = arith.constant 0 : i32
    return %c0_i32, %c0_i32_0 : i32, i32
  }
  func.func @transform_3(%arg0: i32) -> (i32, i32) {
    %c0_i32 = arith.constant 0 : i32
    %c0_i32_0 = arith.constant 0 : i32
    %c0_i32_1 = arith.constant 0 : i32
    return %c0_i32, %c0_i32_0 : i32, i32
  }
  func.func @transform_4(%arg0: i32) -> (i32, i32) {
    %c0_i32 = arith.constant 0 : i32
    %c0_i32_0 = arith.constant 0 : i32
    %c0_i32_1 = arith.constant 0 : i32
    return %c0_i32, %c0_i32_0 : i32, i32
  }
  func.func @transform_5(%arg0: i32) -> i32 {
    %c0_i32 = arith.constant 0 : i32
    %c0_i32_0 = arith.constant 0 : i32
    return %c0_i32 : i32
  }
  func.func @transform_6(%arg0: i32) -> (i32, i32) {
    %c0_i32 = arith.constant 0 : i32
    %c0_i32_0 = arith.constant 0 : i32
    return %c0_i32, %arg0 : i32, i32
  }
}

</mosaic_0001>

<llo_original>
// kernel: tpu_custom_call.1
$region0: #{tpu_custom_call.1}
  #allocation0 [shape = 'u32[]', space=smem, size = 0x4, offset = 0x4, fixed_abs, tag = 'smem constant byte address 0x4 - core index']
  #allocation1 [shape = 'u32[144,128]{1,0:T(1,128)}', space=vmem, size = 0x12000, scoped, tag = 'internal scratch']
  #allocation2 [shape = 'f32[1]{0:T(128)S(6)}', space=smem, size = 0x200, scoped, tag = 'scoped memory for tpu_custom_call.1']
  %s0 = inlined_call_operand.vmem [shape: f32[16,16], index: 0, kind: input, shape index: {}]
  %s1 = inlined_call_operand.vmem [shape: f32[128,16], index: 1, kind: input, shape index: {}]
  %s2 = inlined_call_operand.vmem [shape: f32[32,1], index: 2, kind: input, shape index: {}]
  %s3 = inlined_call_operand.vmem [shape: f32[32,1], index: 3, kind: input, shape index: {}]
  %s4 = inlined_call_operand.vmem [shape: f32[32,1], index: 4, kind: input, shape index: {}]
  %s5 = inlined_call_operand.<no memory space> [shape: f32[1], index: 5, kind: input, shape index: {}]
  %s6 = inlined_call_operand.hbm [shape: f32[1,16], index: 6, kind: output, shape index: {}]
  %s7 = sld [smem:[#allocation0]]
  $region34: #{tpu_custom_call.1} parent=0
    _
  %s9 = ssub.s32 1, %s7
  %s10 = scalar_select 0, %s9, %s7
  %11 = sst [smem:[#allocation2]] %s5
  $region1: #{tpu_custom_call.1} parent=0
    #allocation3 [shape = 'u8[512]{0}', space=vmem, size = 0x400, scoped, tag = 'output window, operand 0, single buffered']
    #allocation4 [shape = 's32[1]{0}', space=sflag, size = 0x4, scoped, tag = 'scoped memory for tpu_custom_call.1']
    %12 = vsyncpa [#allocation4], 0
    // Predicated region
    $region2: #{tpu_custom_call.1} parent=1 // pred_check
      _
    $region3: #{tpu_custom_call.1} parent=1 // pred_check_branch
      %14 = sbr.rel (0) target = $region5
    $region4: #{tpu_custom_call.1} parent=1 // pred_region
      _
    $region5: #{tpu_custom_call.1} parent=1 // pred_fallthru
      _
    // Predicated region
    $region6: #{tpu_custom_call.1} parent=1 // pred_check
      _
    $region7: #{tpu_custom_call.1} parent=1 // pred_check_branch
      %16 = sbr.rel (0) target = $region9
    $region8: #{tpu_custom_call.1} parent=1 // pred_region
      _
    $region9: #{tpu_custom_call.1} parent=1 // pred_fallthru
      _
    // Predicated region
    $region10: #{tpu_custom_call.1} parent=1 // pred_check
      _
    $region11: #{tpu_custom_call.1} parent=1 // pred_check_branch
      %18 = sbr.rel (0) target = $region13
    $region12: #{tpu_custom_call.1} parent=1 // pred_region
      _
    $region13: #{tpu_custom_call.1} parent=1 // pred_fallthru
      _
    // Predicated region
    $region14: #{tpu_custom_call.1} parent=1 // pred_check
      _
    $region15: #{tpu_custom_call.1} parent=1 // pred_check_branch
      %20 = sbr.rel (0) target = $region17
    $region16: #{tpu_custom_call.1} parent=1 // pred_region
      _
    $region17: #{tpu_custom_call.1} parent=1 // pred_fallthru
      _
    // Predicated region
    $region18: #{tpu_custom_call.1} parent=1 // pred_check
      _
    $region19: #{tpu_custom_call.1} parent=1 // pred_check_branch
      %22 = sbr.rel (0) target = $region21
    $region20: #{tpu_custom_call.1} parent=1 // pred_region
      _
    $region21: #{tpu_custom_call.1} parent=1 // pred_fallthru
      _
    // Predicated region
    $region22: #{tpu_custom_call.1} parent=1 // pred_check
      _
    $region23: #{tpu_custom_call.1} parent=1 // pred_check_branch
      %24 = sbr.rel (0) target = $region25
    $region24: #{tpu_custom_call.1} parent=1 // pred_region
      _
    $region25: #{tpu_custom_call.1} parent=1 // pred_fallthru
      _
    %v25 = vld [vmem:[%s1] sm:$0xff]
    %v26 = vld [vmem:[%s1 + $0x8] sm:$0xff]
    %v27 = vld [vmem:[%s1 + $0x10] sm:$0xff]
    %v28 = vld [vmem:[%s1 + $0x18] sm:$0xff]
    %v29 = vld [vmem:[%s1 + $0x20] sm:$0xff]
    %v30 = vld [vmem:[%s1 + $0x28] sm:$0xff]
    %v31 = vld [vmem:[%s1 + $0x30] sm:$0xff]
    %v32 = vld [vmem:[%s1 + $0x38] sm:$0xff]
    %v33 = vld [vmem:[%s1 + $0x40] sm:$0xff]
    %v34 = vld [vmem:[%s1 + $0x48] sm:$0xff]
    %v35 = vld [vmem:[%s1 + $0x50] sm:$0xff]
    %v36 = vld [vmem:[%s1 + $0x58] sm:$0xff]
    %v37 = vld [vmem:[%s1 + $0x60] sm:$0xff]
    %v38 = vld [vmem:[%s1 + $0x68] sm:$0xff]
    %v39 = vld [vmem:[%s1 + $0x70] sm:$0xff]
    %v40 = vld [vmem:[%s1 + $0x78] sm:$0xff]
    %v41 = vld [vmem:[%s0] sm:$0xff]
    %v42 = vld [vmem:[%s0 + $0x8] sm:$0xff]
    %vm43 = vcmask 130048
    %v45 = vsel %vm43, %v25, 0
    %v48 = vsel %vm43, %v26, 0
    %v51 = vsel %vm43, %v27, 0
    %v54 = vsel %vm43, %v28, 0
    %v57 = vsel %vm43, %v29, 0
    %v60 = vsel %vm43, %v30, 0
    %v63 = vsel %vm43, %v31, 0
    %v66 = vsel %vm43, %v32, 0
    %v69 = vsel %vm43, %v33, 0
    %v72 = vsel %vm43, %v34, 0
    %v75 = vsel %vm43, %v35, 0
    %v78 = vsel %vm43, %v36, 0
    %v81 = vsel %vm43, %v37, 0
    %v84 = vsel %vm43, %v38, 0
    %v87 = vsel %vm43, %v39, 0
    %v90 = vsel %vm43, %v40, 0
    %v93 = vsel %vm43, %v41, 0
    %v96 = vsel %vm43, %v42, 0
    %98 = vmatprep.subr.mxu0 0.0
    %99 = vmatpush1.xpose.msra.mxu0 %v93
    %100 = vmatprep.subr.mxu0 0.0
    %101 = vmatpush1.xpose.msra.mxu0 %v96
    %102 = vmatprep.subr.mxu0 0.0
    %103 = vmatpush1.xpose.msra.mxu0 0.0
    %104 = vmatprep.subr.mxu0 0.0
    %105 = vmatpush1.xpose.msra.mxu0 0.0
    %106 = vmatprep.subr.mxu0 0.0
    %107 = vmatpush1.xpose.msra.mxu0 0.0
    %108 = vmatprep.subr.mxu0 0.0
    %109 = vmatpush1.xpose.msra.mxu0 0.0
    %110 = vmatprep.subr.mxu0 0.0
    %111 = vmatpush1.xpose.msra.mxu0 0.0
    %112 = vmatprep.subr.mxu0 0.0
    %113 = vmatpush1.xpose.msra.mxu0 0.0
    %114 = vmatprep.subr.mxu0 0.0
    %115 = vmatpush1.xpose.msra.mxu0 0.0
    %116 = vmatprep.subr.mxu0 0.0
    %117 = vmatpush1.xpose.msra.mxu0 0.0
    %118 = vmatprep.subr.mxu0 0.0
    %119 = vmatpush1.xpose.msra.mxu0 0.0
    %120 = vmatprep.subr.mxu0 0.0
    %121 = vmatpush1.xpose.msra.mxu0 0.0
    %122 = vmatprep.subr.mxu0 0.0
    %123 = vmatpush1.xpose.msra.mxu0 0.0
    %124 = vmatprep.subr.mxu0 0.0
    %125 = vmatpush1.xpose.msra.mxu0 0.0
    %126 = vmatprep.subr.mxu0 0.0
    %127 = vmatpush1.xpose.msra.mxu0 0.0
    %128 = vmatprep.subr.mxu0 0.0
    %129 = vmatpush1.xpose.msra.mxu0 0.0
    %130 = vmatprep.subr.mxu0 0.0
    %131 = vmatpush1.xpose.msra.mxu0 0.0
    %132 = vmatprep.subr.mxu0 0.0
    %133 = vmatpush1.xpose.msra.mxu0 0.0
    %134 = vmatprep.subr.mxu0 0.0
    %135 = vmatpush1.xpose.msra.mxu0 0.0
    %136 = vmatprep.subr.mxu0 0.0
    %137 = vmatpush1.xpose.msra.mxu0 0.0
    %138 = vmatprep.subr.mxu0 0.0
    %139 = vmatpush1.xpose.msra.mxu0 0.0
    %140 = vmatprep.subr.mxu0 0.0
    %141 = vmatpush1.xpose.msra.mxu0 0.0
    %142 = vmatprep.subr.mxu0 0.0
    %143 = vmatpush1.xpose.msra.mxu0 0.0
    %144 = vmatprep.subr.mxu0 0.0
    %145 = vmatpush1.xpose.msra.mxu0 0.0
    %146 = vmatprep.subr.mxu0 0.0
    %147 = vmatpush1.xpose.msra.mxu0 0.0
    %148 = vmatprep.subr.mxu0 0.0
    %149 = vmatpush1.xpose.msra.mxu0 0.0
    %150 = vmatprep.subr.mxu0 0.0
    %151 = vmatpush1.xpose.msra.mxu0 0.0
    %152 = vmatprep.subr.mxu0 0.0
    %153 = vmatpush1.xpose.msra.mxu0 0.0
    %154 = vmatprep.subr.mxu0 0.0
    %155 = vmatpush1.xpose.msra.mxu0 0.0
    %156 = vmatprep.subr.mxu0 0.0
    %157 = vmatpush1.xpose.msra.mxu0 0.0
    %158 = vmatprep.subr.mxu0 0.0
    %159 = vmatpush1.xpose.msra.mxu0 0.0
    %160 = vmatprep.subr.mxu0 0.0
    %161 = vmatpush1.xpose.msra.mxu0 0.0
    %162 = vmatprep.mubr.f32.mxu0 0.0
    %163 = vmatmul.mubr.f32.gmra.mrb[0].mxu0 %v45
    %v164 = vpop.f32.mrb[0].mxu0
    %v165 = vadd.f32 0.0, %v164
    %v166 = vpop.f32.mrb[0].mxu0
    %167 = vmatprep.mubr.f32.mxu0 0.0
    %168 = vmatmul.mubr.f32.gmra.mrb[0].mxu0 %v48
    %v169 = vpop.f32.mrb[0].mxu0
    %v170 = vadd.f32 0.0, %v169
    %v171 = vpop.f32.mrb[0].mxu0
    %172 = vmatprep.mubr.f32.mxu0 0.0
    %173 = vmatmul.mubr.f32.gmra.mrb[0].mxu0 %v51
    %v174 = vpop.f32.mrb[0].mxu0
    %v175 = vadd.f32 0.0, %v174
    %v176 = vpop.f32.mrb[0].mxu0
    %177 = vmatprep.mubr.f32.mxu0 0.0
    %178 = vmatmul.mubr.f32.gmra.mrb[0].mxu0 %v54
    %v179 = vpop.f32.mrb[0].mxu0
    %v180 = vadd.f32 0.0, %v179
    %v181 = vpop.f32.mrb[0].mxu0
    %182 = vmatprep.mubr.f32.mxu0 0.0
    %183 = vmatmul.mubr.f32.gmra.mrb[0].mxu0 %v57
    %v184 = vpop.f32.mrb[0].mxu0
    %v185 = vadd.f32 0.0, %v184
    %v186 = vpop.f32.mrb[0].mxu0
    %187 = vmatprep.mubr.f32.mxu0 0.0
    %188 = vmatmul.mubr.f32.gmra.mrb[0].mxu0 %v60
    %v189 = vpop.f32.mrb[0].mxu0
    %v190 = vadd.f32 0.0, %v189
    %v191 = vpop.f32.mrb[0].mxu0
    %192 = vmatprep.mubr.f32.mxu0 0.0
    %193 = vmatmul.mubr.f32.gmra.mrb[0].mxu0 %v63
    %v194 = vpop.f32.mrb[0].mxu0
    %v195 = vadd.f32 0.0, %v194
    %v196 = vpop.f32.mrb[0].mxu0
    %197 = vmatprep.mubr.f32.mxu0 0.0
    %198 = vmatmul.mubr.f32.gmra.mrb[0].mxu0 %v66
    %v199 = vpop.f32.mrb[0].mxu0
    %v200 = vadd.f32 0.0, %v199
    %v201 = vpop.f32.mrb[0].mxu0
    %202 = vmatprep.mubr.f32.mxu0 0.0
    %203 = vmatmul.mubr.f32.gmra.mrb[0].mxu0 %v69
    %v204 = vpop.f32.mrb[0].mxu0
    %v205 = vadd.f32 0.0, %v204
    %v206 = vpop.f32.mrb[0].mxu0
    %207 = vmatprep.mubr.f32.mxu0 0.0
    %208 = vmatmul.mubr.f32.gmra.mrb[0].mxu0 %v72
    %v209 = vpop.f32.mrb[0].mxu0
    %v210 = vadd.f32 0.0, %v209
    %v211 = vpop.f32.mrb[0].mxu0
    %212 = vmatprep.mubr.f32.mxu0 0.0
    %213 = vmatmul.mubr.f32.gmra.mrb[0].mxu0 %v75
    %v214 = vpop.f32.mrb[0].mxu0
    %v215 = vadd.f32 0.0, %v214
    %v216 = vpop.f32.mrb[0].mxu0
    %217 = vmatprep.mubr.f32.mxu0 0.0
    %218 = vmatmul.mubr.f32.gmra.mrb[0].mxu0 %v78
    %v219 = vpop.f32.mrb[0].mxu0
    %v220 = vadd.f32 0.0, %v219
    %v221 = vpop.f32.mrb[0].mxu0
    %222 = vmatprep.mubr.f32.mxu0 0.0
    %223 = vmatmul.mubr.f32.gmra.mrb[0].mxu0 %v81
    %v224 = vpop.f32.mrb[0].mxu0
    %v225 = vadd.f32 0.0, %v224
    %v226 = vpop.f32.mrb[0].mxu0
    %227 = vmatprep.mubr.f32.mxu0 0.0
    %228 = vmatmul.mubr.f32.gmra.mrb[0].mxu0 %v84
    %v229 = vpop.f32.mrb[0].mxu0
    %v230 = vadd.f32 0.0, %v229
    %v231 = vpop.f32.mrb[0].mxu0
    %232 = vmatprep.mubr.f32.mxu0 0.0
    %233 = vmatmul.mubr.f32.gmra.mrb[0].mxu0 %v87
    %v234 = vpop.f32.mrb[0].mxu0
    %v235 = vadd.f32 0.0, %v234
    %v236 = vpop.f32.mrb[0].mxu0
    %237 = vmatprep.mubr.f32.mxu0 0.0
    %238 = vmatmul.mubr.f32.gmra.mrb[0].mxu0 %v90
    %v239 = vpop.f32.mrb[0].mxu0
    %v240 = vadd.f32 0.0, %v239
    %v241 = vpop.f32.mrb[0].mxu0
    %242 = vdwg.mxu0
    %v243 = vmul.f32 %v165, %v165
    %v244 = vmul.f32 %v170, %v170
    %v245 = vmul.f32 %v175, %v175
    %v246 = vmul.f32 %v180, %v180
    %v247 = vmul.f32 %v185, %v185
    %v248 = vmul.f32 %v190, %v190
    %v249 = vmul.f32 %v195, %v195
    %v250 = vmul.f32 %v200, %v200
    %v251 = vsub.f32 %v243, %v247
    %v252 = vsub.f32 %v244, %v248
    %v253 = vsub.f32 %v245, %v249
    %v254 = vsub.f32 %v246, %v250
    %v255 = vmul.f32 %v205, %v205
    %v256 = vmul.f32 %v210, %v210
    %v257 = vmul.f32 %v215, %v215
    %v258 = vmul.f32 %v220, %v220
    %v259 = vsub.f32 %v251, %v255
    %v260 = vsub.f32 %v252, %v256
    %v261 = vsub.f32 %v253, %v257
    %v262 = vsub.f32 %v254, %v258
    %v263 = vmul.f32 %v225, %v225
    %v264 = vmul.f32 %v230, %v230
    %v265 = vmul.f32 %v235, %v235
    %v266 = vmul.f32 %v240, %v240
    %v267 = vsub.f32 %v259, %v263
    %v268 = vsub.f32 %v260, %v264
    %v269 = vsub.f32 %v261, %v265
    %v270 = vsub.f32 %v262, %v266
    %v271 = vld [vmem:[%s3] sm:$0xff]
    %v272 = vld [vmem:[%s3 + $0x8] sm:$0xff]
    %v273 = vld [vmem:[%s3 + $0x10] sm:$0xff]
    %v274 = vld [vmem:[%s3 + $0x18] sm:$0xff]
    %276 = vset.pattern.permute.xlu0 0
    %277 = vperm.xlu0 %276, %v271
    %v278 = vpop.permute.xlu0 %277
    %281 = vset.pattern.permute.xlu0 0
    %282 = vperm.xlu0 %281, %v272
    %v283 = vpop.permute.xlu0 %282
    %286 = vset.pattern.permute.xlu0 0
    %287 = vperm.xlu0 %286, %v273
    %v288 = vpop.permute.xlu0 %287
    %291 = vset.pattern.permute.xlu0 0
    %292 = vperm.xlu0 %291, %v274
    %v293 = vpop.permute.xlu0 %292
    %v295 = vmul.f32 %v278, %v267
    %v296 = vmul.f32 %v283, %v268
    %v297 = vmul.f32 %v288, %v269
    %v298 = vmul.f32 %v293, %v270
    %v299 = vld [vmem:[%s2] sm:$0xff]
    %v300 = vld [vmem:[%s2 + $0x8] sm:$0xff]
    %v301 = vld [vmem:[%s2 + $0x10] sm:$0xff]
    %v302 = vld [vmem:[%s2 + $0x18] sm:$0xff]
    %304 = vset.pattern.permute.xlu0 0
    %305 = vperm.xlu0 %304, %v299
    %v306 = vpop.permute.xlu0 %305
    %309 = vset.pattern.permute.xlu0 0
    %310 = vperm.xlu0 %309, %v300
    %v311 = vpop.permute.xlu0 %310
    %314 = vset.pattern.permute.xlu0 0
    %315 = vperm.xlu0 %314, %v301
    %v316 = vpop.permute.xlu0 %315
    %319 = vset.pattern.permute.xlu0 0
    %320 = vperm.xlu0 %319, %v302
    %v321 = vpop.permute.xlu0 %320
    %v323 = vadd.f32 %v295, %v306
    %v324 = vadd.f32 %v296, %v311
    %v325 = vadd.f32 %v297, %v316
    %v326 = vadd.f32 %v298, %v321
    %v327 = vmul.f32 %v323, -1.702
    %v328 = vmul.f32 %v324, -1.702
    %v329 = vmul.f32 %v325, -1.702
    %v330 = vmul.f32 %v326, -1.702
    %v331 = vmul.f32 %v327, 1.442695
    %v332 = vpow.pop %v331
    %v333 = vmul.f32 %v328, 1.442695
    %v334 = vpow.pop %v333
    %v335 = vmul.f32 %v329, 1.442695
    %v336 = vpow.pop %v335
    %v337 = vmul.f32 %v330, 1.442695
    %v338 = vpow.pop %v337
    %v339 = vadd.f32 %v332, 1.0
    %v340 = vadd.f32 %v334, 1.0
    %v341 = vadd.f32 %v336, 1.0
    %v342 = vadd.f32 %v338, 1.0
    %v343 = vrcp.pop %v339
    %v344 = vmul.f32 %v323, %v343
    %v345 = vrcp.pop %v340
    %v346 = vmul.f32 %v324, %v345
    %v347 = vrcp.pop %v341
    %v348 = vmul.f32 %v325, %v347
    %v349 = vrcp.pop %v342
    %v350 = vmul.f32 %v326, %v349
    %v351 = vmul.f32 %v295, %v344
    %v352 = vmul.f32 %v296, %v346
    %v353 = vmul.f32 %v297, %v348
    %v354 = vmul.f32 %v298, %v350
    %v355 = vld [vmem:[%s4] sm:$0xff]
    %v356 = vld [vmem:[%s4 + $0x8] sm:$0xff]
    %v357 = vld [vmem:[%s4 + $0x10] sm:$0xff]
    %v358 = vld [vmem:[%s4 + $0x18] sm:$0xff]
    %360 = vset.pattern.permute.xlu0 0
    %361 = vperm.xlu0 %360, %v355
    %v362 = vpop.permute.xlu0 %361
    %365 = vset.pattern.permute.xlu0 0
    %366 = vperm.xlu0 %365, %v356
    %v367 = vpop.permute.xlu0 %366
    %370 = vset.pattern.permute.xlu0 0
    %371 = vperm.xlu0 %370, %v357
    %v372 = vpop.permute.xlu0 %371
    %375 = vset.pattern.permute.xlu0 0
    %376 = vperm.xlu0 %375, %v358
    %v377 = vpop.permute.xlu0 %376
    %v379 = vmul.f32 %v362, %v351
    %v380 = vmul.f32 %v367, %v352
    %v381 = vmul.f32 %v372, %v353
    %v382 = vmul.f32 %v377, %v354
    %v383 = vsel %vm43, %v379, 0.0
    %v384 = vsel %vm43, %v380, 0.0
    %v385 = vadd.f32 %v383, %v384
    %v386 = vsel %vm43, %v381, 0.0
    %v387 = vadd.f32 %v385, %v386
    %v388 = vsel %vm43, %v382, 0.0
    %v389 = vadd.f32 %v387, %v388
    %v390 = vrot.slane %v389, 4
    %v391 = vadd.f32 %v389, %v390
    %v392 = vrot.slane %v391, 2
    %v393 = vadd.f32 %v391, %v392
    %v394 = vrot.slane %v393, 1
    %v395 = vadd.f32 %v393, %v394
    %s396 = sld [smem:[#allocation2]]
    %v397 = vstv %s396
    %v398 = vadd.f32 %v395, %v397
    %vm399 = vcmask 122880
    %400 = vst.msk [vmem:[#allocation3] sm:$0x1] %vm399, %v398
    // Predicated region
    $region26: #{tpu_custom_call.1} parent=1 // pred_check
      _
    $region27: #{tpu_custom_call.1} parent=1 // pred_check_branch
      %402 = sbr.rel (0) target = $region29
    $region28: #{tpu_custom_call.1} parent=1 // pred_region
      %s404 = ssub.s32 16, 16
      %405 = vsyncadd [#allocation4], %s404
      %s407 = sshll.u32 [#allocation3], 4
      %s408 = int_to_ptr.vmem [resolvable:$true] %s407
      %410 = dma.vmem_to_hbm [thread:$0]  %s408, 16, %s6, [#allocation4]
    $region29: #{tpu_custom_call.1} parent=1 // pred_fallthru
      _
    // Predicated region
    $region30: #{tpu_custom_call.1} parent=1 // pred_check
      _
    $region31: #{tpu_custom_call.1} parent=1 // pred_check_branch
      %412 = sbr.rel (0) target = $region33
    $region32: #{tpu_custom_call.1} parent=1 // pred_region
      %413 = dma.done [#allocation4], 16
    $region33: #{tpu_custom_call.1} parent=1 // pred_fallthru
      _
    %414 = vsyncpa [#allocation4], 1

</llo_original>
